<compile_context>
chip_gen: v7x
topology: tpu7x:2x2x1
jax: 0.10.0
libtpu: 0.0.40
codegen_flags: <defaults>
</compile_context>

<pallas_src>
import jax
import jax.numpy as jnp
from jax.experimental import pallas as pl
from jax.experimental.pallas import tpu as pltpu


def _reverse_block_kernel(x_ref, o_ref):
    """x_ref holds TF frames (leading axis) of the block-reversed source;
    reverse the frame order within the block while streaming to the output.

    The per-frame copies are leading-axis VMEM moves (cheap); the kernel is
    DMA-bound, so this in-block shuffle rides in otherwise-free slots.
    """
    tf = x_ref.shape[0]
    if tf == 1:
        o_ref[...] = x_ref[...]
    else:
        def body(i, carry):
            o_ref[i] = x_ref[tf - 1 - i]
            return carry
        jax.lax.fori_loop(0, tf, body, 0, unroll=min(tf, 8))


def _frames_per_block(T: int, frame_bytes: int, max_block_bytes: int) -> int:
    """Largest divisor of T whose TF-frame block fits the byte budget.

    TF must divide T exactly so that reversing block order (index_map) plus
    reversing frames inside each block composes to an exact time reversal.
    """
    tf = 1
    for d in range(1, T + 1):
        if T % d == 0 and d * frame_bytes <= max_block_bytes:
            tf = d
    return tf


def reverse_time_tchw(vid: jax.Array, max_block_bytes: int = 2 * 1024 * 1024) -> jax.Array:
    """Flip `vid` (T, C, H, W) along the time axis with a Pallas copy kernel."""
    T, C, H, W = vid.shape
    F = C * H * W
    itemsize = jnp.dtype(vid.dtype).itemsize
    frame_bytes = F * itemsize

    # Block budget of ~2 MiB => double-buffered input + output ~= 8 MiB of
    # VMEM, comfortably inside the default scoped limit on v5e/v6e/v7x.
    if F % 128 == 0:
        # Lane-dense 3-D layout: last dim is exactly 128 lanes, second-to-last
        # is the full F//128 (or an 8-multiple tile of it), time is a free
        # leading axis for the block.
        R = F // 128
        x = vid.reshape(T, R, 128)

        TF = _frames_per_block(T, frame_bytes, max_block_bytes)
        if TF * frame_bytes <= max_block_bytes:
            RB = R                      # whole frame(s) per block
        else:
            # Single frame exceeds the budget (e.g. 3x1080x1920 f32 ~ 24 MiB):
            # tile the flattened spatial axis in 8-sublane multiples.
            RB = (max_block_bytes // (TF * 128 * itemsize)) // 8 * 8
            RB = max(8, min(RB, R))

        nb_t = T // TF
        nb_r = pl.cdiv(R, RB)

        out = pl.pallas_call(
            _reverse_block_kernel,
            out_shape=jax.ShapeDtypeStruct(x.shape, x.dtype),
            grid=(nb_t, nb_r),
            in_specs=[pl.BlockSpec((TF, RB, 128),
                                   lambda t, r: (nb_t - 1 - t, r, 0))],
            out_specs=pl.BlockSpec((TF, RB, 128),
                                   lambda t, r: (t, r, 0)),
            compiler_params=pltpu.CompilerParams(
                # No carried state: every (t, r) block is independent, so both
                # axes can be sharded across TensorCores (helps v7x, neutral
                # on single-core v5e/v6e).
                dimension_semantics=("parallel", "parallel"),
            ),
        )(x)
        return out.reshape(T, C, H, W)

    # Fallback: flattened frame not a multiple of 128 lanes — keep a 2-D
    # (T, F) layout with full-F blocks (last block dim == full array dim).
    x = vid.reshape(T, F)
    TF = _frames_per_block(T, frame_bytes, max_block_bytes)
    nb_t = T // TF
    out = pl.pallas_call(
        _reverse_block_kernel,
        out_shape=jax.ShapeDtypeStruct(x.shape, x.dtype),
        grid=(nb_t,),
        in_specs=[pl.BlockSpec((TF, F), lambda t: (nb_t - 1 - t, 0))],
        out_specs=pl.BlockSpec((TF, F), lambda t: (t, 0)),
        compiler_params=pltpu.CompilerParams(
            dimension_semantics=("parallel",),
        ),
    )(x)
    return out.reshape(T, C, H, W)


def reverse_for_time_for_tchw_forward(vid: jax.Array, key, p: float = 0.1) -> jax.Array:
    """Full module forward: Bernoulli(p) draw (glue), then conditional flip.

    The identity branch returns `vid` directly — no HBM round-trip copy is
    paid on the (1 - p) common path; the Pallas kernel only runs when the
    time reversal is taken.
    """
    coin = jax.random.uniform(key, ())
    return jax.lax.cond(coin < p, reverse_time_tchw, lambda v: v, vid)


if __name__ == "__main__":
    key = jax.random.PRNGKey(0)
    k_data, k_coin = jax.random.split(key)

    # Small TCHW video: T=8 frames, C=4 channels, 16x16 spatial.
    T, C, H, W = 8, 4, 16, 16
    vid = jax.random.normal(k_data, (T, C, H, W), dtype=jnp.float32)

    # Reverse branch (the Pallas kernel) vs pure-JAX reference.
    out_flip = jax.block_until_ready(reverse_time_tchw(vid))
    assert jnp.allclose(out_flip, jnp.flip(vid, axis=0)), "reverse kernel mismatch"

    # Full module forward (stochastic branch decided by deterministic key).
    out = jax.block_until_ready(
        reverse_for_time_for_tchw_forward(vid, k_coin, p=0.1))
    coin = jax.random.uniform(k_coin, ())
    expect = jnp.where(coin < 0.1, jnp.flip(vid, axis=0), vid)
    assert jnp.allclose(out, expect), "forward output mismatch"

    print("KERNEL_OK")
</pallas_src>

<mosaic_0001>
module attributes {stable_mosaic.version = 11 : i64} {
  func.func @_reverse_block_kernel(%arg0: i32, %arg1: i32, %arg2: memref<8x8x128xf32, #tpu.memory_space<vmem>>, %arg3: memref<8x8x128xf32, #tpu.memory_space<vmem>>) attributes {dimension_semantics = [#tpu.dimension_semantics<parallel>, #tpu.dimension_semantics<parallel>], iteration_bounds = array<i64: 1, 1>, scalar_prefetch = 0 : i64, scratch_operands = 0 : i64, tpu.core_type = #tpu.core_type<tc>, window_params = [{transform_indices = @transform_0, window_bounds = array<i64: 8, 8, 128>}, {transform_indices = @transform_1, window_bounds = array<i64: 8, 8, 128>}]} {
    %c0_i32 = arith.constant 0 : i32
    %c7_i32 = arith.constant 7 : i32
    %0 = arith.subi %c7_i32, %c0_i32 : i32
    %1 = arith.index_cast %0 : i32 to index
    %c0 = arith.constant 0 : index
    %c0_0 = arith.constant 0 : index
    %2 = vector.load %arg2[%1, %c0, %c0_0] : memref<8x8x128xf32, #tpu.memory_space<vmem>>, vector<1x8x128xf32>
    %3 = vector.shape_cast %2 : vector<1x8x128xf32> to vector<8x128xf32>
    %4 = arith.index_cast %c0_i32 : i32 to index
    %c0_1 = arith.constant 0 : index
    %c0_2 = arith.constant 0 : index
    %5 = vector.load %arg3[%4, %c0_1, %c0_2] : memref<8x8x128xf32, #tpu.memory_space<vmem>>, vector<1x8x128xf32>
    %6 = vector.shape_cast %5 : vector<1x8x128xf32> to vector<8x128xf32>
    %7 = vector.shape_cast %3 : vector<8x128xf32> to vector<1x8x128xf32>
    tpu.vector_store %arg3[%4, %c0_1, %c0_2], %7 {strides = array<i32>} : memref<8x8x128xf32, #tpu.memory_space<vmem>>, vector<1x8x128xf32>,
    %c1_i32 = arith.constant 1 : i32
    %c7_i32_3 = arith.constant 7 : i32
    %8 = arith.subi %c7_i32_3, %c1_i32 : i32
    %9 = arith.index_cast %8 : i32 to index
    %c0_4 = arith.constant 0 : index
    %c0_5 = arith.constant 0 : index
    %10 = vector.load %arg2[%9, %c0_4, %c0_5] : memref<8x8x128xf32, #tpu.memory_space<vmem>>, vector<1x8x128xf32>
    %11 = vector.shape_cast %10 : vector<1x8x128xf32> to vector<8x128xf32>
    %12 = arith.index_cast %c1_i32 : i32 to index
    %c0_6 = arith.constant 0 : index
    %c0_7 = arith.constant 0 : index
    %13 = vector.load %arg3[%12, %c0_6, %c0_7] : memref<8x8x128xf32, #tpu.memory_space<vmem>>, vector<1x8x128xf32>
    %14 = vector.shape_cast %13 : vector<1x8x128xf32> to vector<8x128xf32>
    %15 = vector.shape_cast %11 : vector<8x128xf32> to vector<1x8x128xf32>
    tpu.vector_store %arg3[%12, %c0_6, %c0_7], %15 {strides = array<i32>} : memref<8x8x128xf32, #tpu.memory_space<vmem>>, vector<1x8x128xf32>,
    %c2_i32 = arith.constant 2 : i32
    %c7_i32_8 = arith.constant 7 : i32
    %16 = arith.subi %c7_i32_8, %c2_i32 : i32
    %17 = arith.index_cast %16 : i32 to index
    %c0_9 = arith.constant 0 : index
    %c0_10 = arith.constant 0 : index
    %18 = vector.load %arg2[%17, %c0_9, %c0_10] : memref<8x8x128xf32, #tpu.memory_space<vmem>>, vector<1x8x128xf32>
    %19 = vector.shape_cast %18 : vector<1x8x128xf32> to vector<8x128xf32>
    %20 = arith.index_cast %c2_i32 : i32 to index
    %c0_11 = arith.constant 0 : index
    %c0_12 = arith.constant 0 : index
    %21 = vector.load %arg3[%20, %c0_11, %c0_12] : memref<8x8x128xf32, #tpu.memory_space<vmem>>, vector<1x8x128xf32>
    %22 = vector.shape_cast %21 : vector<1x8x128xf32> to vector<8x128xf32>
    %23 = vector.shape_cast %19 : vector<8x128xf32> to vector<1x8x128xf32>
    tpu.vector_store %arg3[%20, %c0_11, %c0_12], %23 {strides = array<i32>} : memref<8x8x128xf32, #tpu.memory_space<vmem>>, vector<1x8x128xf32>,
    %c3_i32 = arith.constant 3 : i32
    %c7_i32_13 = arith.constant 7 : i32
    %24 = arith.subi %c7_i32_13, %c3_i32 : i32
    %25 = arith.index_cast %24 : i32 to index
    %c0_14 = arith.constant 0 : index
    %c0_15 = arith.constant 0 : index
    %26 = vector.load %arg2[%25, %c0_14, %c0_15] : memref<8x8x128xf32, #tpu.memory_space<vmem>>, vector<1x8x128xf32>
    %27 = vector.shape_cast %26 : vector<1x8x128xf32> to vector<8x128xf32>
    %28 = arith.index_cast %c3_i32 : i32 to index
    %c0_16 = arith.constant 0 : index
    %c0_17 = arith.constant 0 : index
    %29 = vector.load %arg3[%28, %c0_16, %c0_17] : memref<8x8x128xf32, #tpu.memory_space<vmem>>, vector<1x8x128xf32>
    %30 = vector.shape_cast %29 : vector<1x8x128xf32> to vector<8x128xf32>
    %31 = vector.shape_cast %27 : vector<8x128xf32> to vector<1x8x128xf32>
    tpu.vector_store %arg3[%28, %c0_16, %c0_17], %31 {strides = array<i32>} : memref<8x8x128xf32, #tpu.memory_space<vmem>>, vector<1x8x128xf32>,
    %c4_i32 = arith.constant 4 : i32
    %c7_i32_18 = arith.constant 7 : i32
    %32 = arith.subi %c7_i32_18, %c4_i32 : i32
    %33 = arith.index_cast %32 : i32 to index
    %c0_19 = arith.constant 0 : index
    %c0_20 = arith.constant 0 : index
    %34 = vector.load %arg2[%33, %c0_19, %c0_20] : memref<8x8x128xf32, #tpu.memory_space<vmem>>, vector<1x8x128xf32>
    %35 = vector.shape_cast %34 : vector<1x8x128xf32> to vector<8x128xf32>
    %36 = arith.index_cast %c4_i32 : i32 to index
    %c0_21 = arith.constant 0 : index
    %c0_22 = arith.constant 0 : index
    %37 = vector.load %arg3[%36, %c0_21, %c0_22] : memref<8x8x128xf32, #tpu.memory_space<vmem>>, vector<1x8x128xf32>
    %38 = vector.shape_cast %37 : vector<1x8x128xf32> to vector<8x128xf32>
    %39 = vector.shape_cast %35 : vector<8x128xf32> to vector<1x8x128xf32>
    tpu.vector_store %arg3[%36, %c0_21, %c0_22], %39 {strides = array<i32>} : memref<8x8x128xf32, #tpu.memory_space<vmem>>, vector<1x8x128xf32>,
    %c5_i32 = arith.constant 5 : i32
    %c7_i32_23 = arith.constant 7 : i32
    %40 = arith.subi %c7_i32_23, %c5_i32 : i32
    %41 = arith.index_cast %40 : i32 to index
    %c0_24 = arith.constant 0 : index
    %c0_25 = arith.constant 0 : index
    %42 = vector.load %arg2[%41, %c0_24, %c0_25] : memref<8x8x128xf32, #tpu.memory_space<vmem>>, vector<1x8x128xf32>
    %43 = vector.shape_cast %42 : vector<1x8x128xf32> to vector<8x128xf32>
    %44 = arith.index_cast %c5_i32 : i32 to index
    %c0_26 = arith.constant 0 : index
    %c0_27 = arith.constant 0 : index
    %45 = vector.load %arg3[%44, %c0_26, %c0_27] : memref<8x8x128xf32, #tpu.memory_space<vmem>>, vector<1x8x128xf32>
    %46 = vector.shape_cast %45 : vector<1x8x128xf32> to vector<8x128xf32>
    %47 = vector.shape_cast %43 : vector<8x128xf32> to vector<1x8x128xf32>
    tpu.vector_store %arg3[%44, %c0_26, %c0_27], %47 {strides = array<i32>} : memref<8x8x128xf32, #tpu.memory_space<vmem>>, vector<1x8x128xf32>,
    %c6_i32 = arith.constant 6 : i32
    %c7_i32_28 = arith.constant 7 : i32
    %48 = arith.subi %c7_i32_28, %c6_i32 : i32
    %49 = arith.index_cast %48 : i32 to index
    %c0_29 = arith.constant 0 : index
    %c0_30 = arith.constant 0 : index
    %50 = vector.load %arg2[%49, %c0_29, %c0_30] : memref<8x8x128xf32, #tpu.memory_space<vmem>>, vector<1x8x128xf32>
    %51 = vector.shape_cast %50 : vector<1x8x128xf32> to vector<8x128xf32>
    %52 = arith.index_cast %c6_i32 : i32 to index
    %c0_31 = arith.constant 0 : index
    %c0_32 = arith.constant 0 : index
    %53 = vector.load %arg3[%52, %c0_31, %c0_32] : memref<8x8x128xf32, #tpu.memory_space<vmem>>, vector<1x8x128xf32>
    %54 = vector.shape_cast %53 : vector<1x8x128xf32> to vector<8x128xf32>
    %55 = vector.shape_cast %51 : vector<8x128xf32> to vector<1x8x128xf32>
    tpu.vector_store %arg3[%52, %c0_31, %c0_32], %55 {strides = array<i32>} : memref<8x8x128xf32, #tpu.memory_space<vmem>>, vector<1x8x128xf32>,
    %c7_i32_33 = arith.constant 7 : i32
    %c7_i32_34 = arith.constant 7 : i32
    %56 = arith.subi %c7_i32_34, %c7_i32_33 : i32
    %57 = arith.index_cast %56 : i32 to index
    %c0_35 = arith.constant 0 : index
    %c0_36 = arith.constant 0 : index
    %58 = vector.load %arg2[%57, %c0_35, %c0_36] : memref<8x8x128xf32, #tpu.memory_space<vmem>>, vector<1x8x128xf32>
    %59 = vector.shape_cast %58 : vector<1x8x128xf32> to vector<8x128xf32>
    %60 = arith.index_cast %c7_i32_33 : i32 to index
    %c0_37 = arith.constant 0 : index
    %c0_38 = arith.constant 0 : index
    %61 = vector.load %arg3[%60, %c0_37, %c0_38] : memref<8x8x128xf32, #tpu.memory_space<vmem>>, vector<1x8x128xf32>
    %62 = vector.shape_cast %61 : vector<1x8x128xf32> to vector<8x128xf32>
    %63 = vector.shape_cast %59 : vector<8x128xf32> to vector<1x8x128xf32>
    tpu.vector_store %arg3[%60, %c0_37, %c0_38], %63 {strides = array<i32>} : memref<8x8x128xf32, #tpu.memory_space<vmem>>, vector<1x8x128xf32>,
    %c8_i32 = arith.constant 8 : i32
    return
  }
  func.func @transform_0(%arg0: i32, %arg1: i32) -> (i32, i32, i32) {
    %c0_i32 = arith.constant 0 : i32
    %0 = arith.subi %c0_i32, %arg0 : i32
    %c0_i32_0 = arith.constant 0 : i32
    %c0_i32_1 = arith.constant 0 : i32
    return %0, %arg1, %c0_i32_0 : i32, i32, i32
  }
  func.func @transform_1(%arg0: i32, %arg1: i32) -> (i32, i32, i32) {
    %c0_i32 = arith.constant 0 : i32
    %c0_i32_0 = arith.constant 0 : i32
    return %arg0, %arg1, %c0_i32 : i32, i32, i32
  }
}

</mosaic_0001>

<llo_original>
// kernel: tpu_custom_call.1
$region0: #{tpu_custom_call.1}
  #allocation0 [shape = 'u32[]', space=smem, size = 0x4, offset = 0x4, fixed_abs, tag = 'smem constant byte address 0x4 - core index']
  #allocation1 [shape = 'u32[144,128]{1,0:T(1,128)}', space=vmem, size = 0x12000, scoped, tag = 'internal scratch']
  %s0 = inlined_call_operand.hbm [shape: f32[8,8,128], index: 0, kind: input, shape index: {}]
  %s1 = inlined_call_operand.hbm [shape: f32[8,8,128], index: 1, kind: output, shape index: {}]
  %s2 = sld [smem:[#allocation0]]
  $region18: #{tpu_custom_call.1} parent=0
    _
  %s4 = ssub.s32 1, %s2
  %s5 = scalar_select 0, %s4, %s2
  $region1: #{tpu_custom_call.1} parent=0
    #allocation2 [shape = 'u8[32768]{0}', space=vmem, size = 0x8000, scoped, tag = 'input window, operand 0, single buffered']
    #allocation3 [shape = 's32[1]{0}', space=sflag, size = 0x4, scoped, tag = 'scoped memory for tpu_custom_call.1']
    #allocation4 [shape = 's32[1]{0}', space=sflag, size = 0x4, scoped, tag = 'scoped memory for tpu_custom_call.1']
    #allocation5 [shape = 'u8[32768]{0}', space=vmem, size = 0x8000, scoped, tag = 'output window, operand 0, single buffered']
    %6 = vsyncpa [#allocation3], 0
    %7 = vsyncpa [#allocation4], 0
    // Predicated region
    $region2: #{tpu_custom_call.1} parent=1 // pred_check
      _
    $region3: #{tpu_custom_call.1} parent=1 // pred_check_branch
      %9 = sbr.rel (0) target = $region5
    $region4: #{tpu_custom_call.1} parent=1 // pred_region
      %s10 = ssub.s32 0, 0
      %s11 = smul.u32 8, %s10
      %s13 = ssub.s32 1024, 1024
      %14 = vsyncadd [#allocation3], %s13
      %s15 = smul.addr %s11, 128
      %s16 = scalar_lea.hbm %s0, %s15
      %s17 = sshll.u32 [#allocation2], 4
      %s18 = int_to_ptr.vmem [resolvable:$true] %s17
      %23 = dma.hbm_to_vmem [thread:$0]  %s16, 1024, %s18, [#allocation3], 128, 128, 8
    $region5: #{tpu_custom_call.1} parent=1 // pred_fallthru
      _
    // Predicated region
    $region6: #{tpu_custom_call.1} parent=1 // pred_check
      _
    $region7: #{tpu_custom_call.1} parent=1 // pred_check_branch
      %25 = sbr.rel (0) target = $region9
    $region8: #{tpu_custom_call.1} parent=1 // pred_region
      %26 = dma.done [#allocation3], 1024
    $region9: #{tpu_custom_call.1} parent=1 // pred_fallthru
      _
    %s27 = ssub.s32 0, 0
    %s28 = smul.u32 8, %s27
    %s29 = scalar_lea.vmem [#allocation2], 56
    %v30 = vld [vmem:[%s29] sm:$0xff]
    %31 = vst [vmem:[#allocation5] sm:$0xff] %v30
    %s32 = scalar_lea.vmem [#allocation2], 48
    %v33 = vld [vmem:[%s32] sm:$0xff]
    %s34 = scalar_lea.vmem [#allocation5], 8
    %35 = vst [vmem:[%s34] sm:$0xff] %v33
    %s36 = scalar_lea.vmem [#allocation2], 40
    %v37 = vld [vmem:[%s36] sm:$0xff]
    %s38 = scalar_lea.vmem [#allocation5], 16
    %39 = vst [vmem:[%s38] sm:$0xff] %v37
    %s40 = scalar_lea.vmem [#allocation2], 32
    %v41 = vld [vmem:[%s40] sm:$0xff]
    %s42 = scalar_lea.vmem [#allocation5], 24
    %43 = vst [vmem:[%s42] sm:$0xff] %v41
    %s44 = scalar_lea.vmem [#allocation2], 24
    %v45 = vld [vmem:[%s44] sm:$0xff]
    %s46 = scalar_lea.vmem [#allocation5], 32
    %47 = vst [vmem:[%s46] sm:$0xff] %v45
    %s48 = scalar_lea.vmem [#allocation2], 16
    %v49 = vld [vmem:[%s48] sm:$0xff]
    %s50 = scalar_lea.vmem [#allocation5], 40
    %51 = vst [vmem:[%s50] sm:$0xff] %v49
    %s52 = scalar_lea.vmem [#allocation2], 8
    %v53 = vld [vmem:[%s52] sm:$0xff]
    %s54 = scalar_lea.vmem [#allocation5], 48
    %55 = vst [vmem:[%s54] sm:$0xff] %v53
    %v56 = vld [vmem:[#allocation2] sm:$0xff]
    %s57 = scalar_lea.vmem [#allocation5], 56
    %58 = vst [vmem:[%s57] sm:$0xff] %v56
    // Predicated region
    $region10: #{tpu_custom_call.1} parent=1 // pred_check
      _
    $region11: #{tpu_custom_call.1} parent=1 // pred_check_branch
      %60 = sbr.rel (0) target = $region13
    $region12: #{tpu_custom_call.1} parent=1 // pred_region
      %s62 = ssub.s32 1024, 1024
      %63 = vsyncadd [#allocation4], %s62
      %s64 = sshll.u32 [#allocation5], 4
      %s65 = int_to_ptr.vmem [resolvable:$true] %s64
      %70 = dma.vmem_to_hbm [thread:$0]  %s65, 1024, %s1, [#allocation4], 128, 128, 8
    $region13: #{tpu_custom_call.1} parent=1 // pred_fallthru
      _
    // Predicated region
    $region14: #{tpu_custom_call.1} parent=1 // pred_check
      _
    $region15: #{tpu_custom_call.1} parent=1 // pred_check_branch
      %72 = sbr.rel (0) target = $region17
    $region16: #{tpu_custom_call.1} parent=1 // pred_region
      %73 = dma.done [#allocation4], 1024
    $region17: #{tpu_custom_call.1} parent=1 // pred_fallthru
      _
    %74 = vsyncpa [#allocation3], 1
    %75 = vsyncpa [#allocation4], 1

</llo_original>
